<compile_context>
chip_gen: v7x
topology: tpu7x:2x2x1
jax: 0.10.0
libtpu: 0.0.40
codegen_flags: <defaults>
</compile_context>

<pallas_src>
import functools

import jax
import jax.numpy as jnp
from jax import lax
from jax.experimental import pallas as pl
from jax.experimental.pallas import tpu as pltpu

LANE = 128
ACC_ROWS = 8            # sublane height of the vector accumulator
MAX_TILE_ROWS = 1024    # 1024 x 128 f32 = 512 KiB per input buffer


def _round_up(a, b):
    return (a + b - 1) // b * b


def _focal_term(e, alpha):
    """|e|^alpha * e^2 with trace-time fast paths (alpha is a Python float)."""
    e2 = e * e
    if alpha == 0.0:
        return e2
    abs_e = jnp.abs(e)
    if alpha == 1.0:
        return abs_e * e2
    if alpha == 2.0:
        return e2 * e2
    if float(alpha).is_integer() and 0.0 < alpha <= 8.0:
        w = abs_e
        for _ in range(int(alpha) - 1):
            w = w * abs_e
        return w * e2
    # Non-integer alpha: fall back to exp/log path on the EUP.
    return jnp.power(abs_e, jnp.float32(alpha)) * e2


# ---------------------------------------------------------------------------
# Kernels
# ---------------------------------------------------------------------------
def _focal_mse_reduce_kernel(x_ref, t_ref, out_ref, *, alpha, n,
                             tiles_per_chunk, tile_rows, needs_mask):
    """Grid = (chunks, tiles-per-chunk). Output block (1,8,128) is the
    per-chunk vector accumulator (resident across the 'arbitrary' axis)."""
    c = pl.program_id(0)
    i = pl.program_id(1)

    @pl.when(i == 0)
    def _():
        out_ref[...] = jnp.zeros_like(out_ref)

    e = x_ref[...].astype(jnp.float32) - t_ref[...].astype(jnp.float32)
    loss = _focal_term(e, alpha)

    if needs_mask:
        # Zero out elements past the true length n (ragged last tile, lane
        # padding, and duplicated clamped tiles from ceil-division chunking).
        g = c * tiles_per_chunk + i          # global tile index
        row = lax.broadcasted_iota(jnp.int32, loss.shape, 0)
        lane = lax.broadcasted_iota(jnp.int32, loss.shape, 1)
        idx = (g * tile_rows + row) * LANE + lane   # global element index
        loss = jnp.where(idx < n, loss, jnp.float32(0.0))

    # Fold (tile_rows, 128) -> (8, 128) with VPU adds (no cross-lane reduce
    # inside the loop); the single full reduction happens in the wrapper.
    partial = loss.reshape(tile_rows // ACC_ROWS, ACC_ROWS, LANE).sum(axis=0)
    out_ref[...] += partial.reshape(1, ACC_ROWS, LANE)


def _focal_mse_elementwise_kernel(x_ref, t_ref, o_ref, *, alpha):
    e = x_ref[...].astype(jnp.float32) - t_ref[...].astype(jnp.float32)
    o_ref[...] = _focal_term(e, alpha).astype(o_ref.dtype)


# ---------------------------------------------------------------------------
# Wrapper
# ---------------------------------------------------------------------------
def focal_mse_loss(x, t, alpha=1.0, reduction="mean"):
    assert x.shape == t.shape, "input/target shape mismatch"
    orig_shape = x.shape
    orig_dtype = x.dtype
    n = int(x.size)
    alpha = float(alpha)

    xf = x.reshape(-1)
    tf = t.reshape(-1)

    # Pad only to a lane multiple (needed to present a 2-D (rows, 128) slab).
    # Ragged row tiles are handled in-kernel by masking, not by padding.
    lane_pad = (-n) % LANE
    if lane_pad:
        xf = jnp.pad(xf, (0, lane_pad))
        tf = jnp.pad(tf, (0, lane_pad))
    rows = (n + lane_pad) // LANE
    x2d = xf.reshape(rows, LANE)
    t2d = tf.reshape(rows, LANE)

    tile_rows = min(MAX_TILE_ROWS, _round_up(rows, ACC_ROWS))
    n_tiles = pl.cdiv(rows, tile_rows)

    vmem_limit = 32 * 1024 * 1024  # far above actual use (~3 MiB); safe on v5e/v6e/v7x

    if reduction in ("mean", "sum"):
        # 2-D grid: 'parallel' chunk axis lets v7x megacore shard the reduce
        # path across both TensorCores; 'arbitrary' axis carries the accumulator.
        n_chunks = 2 if n_tiles >= 2 else 1
        tiles_per_chunk = pl.cdiv(n_tiles, n_chunks)
        covered = n_chunks * tiles_per_chunk * tile_rows * LANE
        needs_mask = covered != n

        if n_chunks * tiles_per_chunk == n_tiles:
            def in_map(c, i):
                return (c * tiles_per_chunk + i, 0)
        else:
            # Clamp the (few) extra grid points to the last real tile; their
            # contribution is zeroed by the in-kernel mask.
            def in_map(c, i):
                return (jnp.minimum(c * tiles_per_chunk + i, n_tiles - 1), 0)

        in_spec = pl.BlockSpec((tile_rows, LANE), in_map)

        partials = pl.pallas_call(
            functools.partial(
                _focal_mse_reduce_kernel, alpha=alpha, n=n,
                tiles_per_chunk=tiles_per_chunk, tile_rows=tile_rows,
                needs_mask=needs_mask),
            out_shape=jax.ShapeDtypeStruct((n_chunks, ACC_ROWS, LANE),
                                           jnp.float32),
            grid_spec=pltpu.PrefetchScalarGridSpec(
                num_scalar_prefetch=0,
                grid=(n_chunks, tiles_per_chunk),
                in_specs=[in_spec, in_spec],
                out_specs=pl.BlockSpec((1, ACC_ROWS, LANE),
                                       lambda c, i: (c, 0, 0)),
            ),
            compiler_params=pltpu.CompilerParams(
                dimension_semantics=("parallel", "arbitrary"),
                vmem_limit_bytes=vmem_limit),
        )(x2d, t2d)

        total = jnp.sum(partials)
        if reduction == "mean":
            total = total / jnp.float32(n)
        if jnp.issubdtype(orig_dtype, jnp.floating):
            total = total.astype(orig_dtype)
        return total

    elif reduction == "none":
        tile_spec = pl.BlockSpec((tile_rows, LANE), lambda i: (i, 0))
        out = pl.pallas_call(
            functools.partial(_focal_mse_elementwise_kernel, alpha=alpha),
            out_shape=jax.ShapeDtypeStruct((rows, LANE), orig_dtype),
            grid_spec=pltpu.PrefetchScalarGridSpec(
                num_scalar_prefetch=0,
                grid=(n_tiles,),
                in_specs=[tile_spec, tile_spec],
                out_specs=tile_spec,
            ),
            compiler_params=pltpu.CompilerParams(
                dimension_semantics=("parallel",),
                vmem_limit_bytes=vmem_limit),
        )(x2d, t2d)
        out = out.reshape(-1)
        if lane_pad:
            out = out[:n]
        return out.reshape(orig_shape)

    else:
        raise ValueError(f"unknown reduction: {reduction}")


# Pure-JAX reference for verification.
def _ref_focal_mse(x, t, alpha=1.0, reduction="mean"):
    e = x.astype(jnp.float32) - t.astype(jnp.float32)
    loss = jnp.abs(e) ** alpha * (e ** 2)
    if reduction == "mean":
        return loss.mean()
    if reduction == "sum":
        return loss.sum()
    return loss


if __name__ == "__main__":
    key = jax.random.PRNGKey(0)
    k1, k2 = jax.random.split(key)
    # Small regression-style shape: (batch, channels, H, W).
    shape = (2, 4, 16, 16)
    x = jax.random.normal(k1, shape, dtype=jnp.float32)
    t = jax.random.normal(k2, shape, dtype=jnp.float32)

    alpha = 1.0

    ok = True
    for red in ("mean", "sum", "none"):
        out = focal_mse_loss(x, t, alpha=alpha, reduction=red)
        out = jax.block_until_ready(out)
        ref = _ref_focal_mse(x, t, alpha=alpha, reduction=red)
        if not jnp.allclose(out, ref.astype(out.dtype), rtol=1e-5, atol=1e-5):
            ok = False
            print(f"MISMATCH for reduction={red}")

    if ok:
        print("KERNEL_OK")
</pallas_src>

<mosaic_0001>
module attributes {stable_mosaic.version = 11 : i64} {
  func.func @_focal_mse_reduce_kernel(%arg0: i32, %arg1: i32, %arg2: memref<16x128xf32, #tpu.memory_space<vmem>>, %arg3: memref<16x128xf32, #tpu.memory_space<vmem>>, %arg4: memref<1x8x128xf32, #tpu.memory_space<vmem>>) attributes {dimension_semantics = [#tpu.dimension_semantics<parallel>, #tpu.dimension_semantics<arbitrary>], iteration_bounds = array<i64: 1, 1>, scalar_prefetch = 0 : i64, scratch_operands = 0 : i64, tpu.core_type = #tpu.core_type<tc>, window_params = [{transform_indices = @transform_0, window_bounds = array<i64: 16, 128>}, {transform_indices = @transform_1, window_bounds = array<i64: 16, 128>}, {transform_indices = @transform_2, window_bounds = array<i64: 1, 8, 128>}]} {
    %c0_i32 = arith.constant 0 : i32
    %0 = arith.cmpi eq, %arg1, %c0_i32 : i32
    %1 = arith.extui %0 : i1 to i32
    %c0_i32_0 = arith.constant 0 : i32
    %2 = arith.cmpi ne, %1, %c0_i32_0 : i32
    scf.if %2 {
      %cst_10 = arith.constant 0.000000e+00 : f32
      %15 = vector.broadcast %cst_10 : f32 to vector<1x8x128xf32>
      %c0_11 = arith.constant 0 : index
      %c0_12 = arith.constant 0 : index
      %c0_13 = arith.constant 0 : index
      %16 = vector.load %arg4[%c0_11, %c0_12, %c0_13] : memref<1x8x128xf32, #tpu.memory_space<vmem>>, vector<1x8x128xf32>
      tpu.vector_store %arg4[%c0_11, %c0_12, %c0_13], %15 {strides = array<i32>} : memref<1x8x128xf32, #tpu.memory_space<vmem>>, vector<1x8x128xf32>,
    } else {
    }
    %c0 = arith.constant 0 : index
    %c0_1 = arith.constant 0 : index
    %3 = vector.load %arg2[%c0, %c0_1] : memref<16x128xf32, #tpu.memory_space<vmem>>, vector<16x128xf32>
    %c0_2 = arith.constant 0 : index
    %c0_3 = arith.constant 0 : index
    %4 = vector.load %arg3[%c0_2, %c0_3] : memref<16x128xf32, #tpu.memory_space<vmem>>, vector<16x128xf32>
    %5 = arith.subf %3, %4 : vector<16x128xf32>
    %6 = arith.mulf %5, %5 : vector<16x128xf32>
    %7 = math.absf %5 : vector<16x128xf32>
    %8 = arith.mulf %7, %6 : vector<16x128xf32>
    %9 = vector.shape_cast %8 : vector<16x128xf32> to vector<2x8x128xf32>
    %cst = arith.constant dense<0.000000e+00> : vector<8x128xf32>
    %10 = vector.multi_reduction <add>, %9, %cst [0] : vector<2x8x128xf32> to vector<8x128xf32>
    %c0_4 = arith.constant 0 : index
    %c0_5 = arith.constant 0 : index
    %c0_6 = arith.constant 0 : index
    %11 = vector.load %arg4[%c0_4, %c0_5, %c0_6] : memref<1x8x128xf32, #tpu.memory_space<vmem>>, vector<1x8x128xf32>
    %12 = vector.shape_cast %10 : vector<8x128xf32> to vector<1x8x128xf32>
    %13 = arith.addf %11, %12 : vector<1x8x128xf32>
    %c0_7 = arith.constant 0 : index
    %c0_8 = arith.constant 0 : index
    %c0_9 = arith.constant 0 : index
    %14 = vector.load %arg4[%c0_7, %c0_8, %c0_9] : memref<1x8x128xf32, #tpu.memory_space<vmem>>, vector<1x8x128xf32>
    tpu.vector_store %arg4[%c0_7, %c0_8, %c0_9], %13 {strides = array<i32>} : memref<1x8x128xf32, #tpu.memory_space<vmem>>, vector<1x8x128xf32>,
    return
  }
  func.func @transform_0(%arg0: i32, %arg1: i32) -> (i32, i32) {
    %c1_i32 = arith.constant 1 : i32
    %0 = arith.muli %arg0, %c1_i32 : i32
    %1 = arith.addi %0, %arg1 : i32
    %c0_i32 = arith.constant 0 : i32
    %c0_i32_0 = arith.constant 0 : i32
    return %1, %c0_i32 : i32, i32
  }
  func.func @transform_1(%arg0: i32, %arg1: i32) -> (i32, i32) {
    %c1_i32 = arith.constant 1 : i32
    %0 = arith.muli %arg0, %c1_i32 : i32
    %1 = arith.addi %0, %arg1 : i32
    %c0_i32 = arith.constant 0 : i32
    %c0_i32_0 = arith.constant 0 : i32
    return %1, %c0_i32 : i32, i32
  }
  func.func @transform_2(%arg0: i32, %arg1: i32) -> (i32, i32, i32) {
    %c0_i32 = arith.constant 0 : i32
    %c0_i32_0 = arith.constant 0 : i32
    %c0_i32_1 = arith.constant 0 : i32
    return %arg0, %c0_i32, %c0_i32_0 : i32, i32, i32
  }
}

</mosaic_0001>

<llo_original>
// kernel: tpu_custom_call.1
$region0: #{tpu_custom_call.1}
  #allocation0 [shape = 'u32[]', space=smem, size = 0x4, offset = 0x4, fixed_abs, tag = 'smem constant byte address 0x4 - core index']
  #allocation1 [shape = 'u32[144,128]{1,0:T(1,128)}', space=vmem, size = 0x12000, scoped, tag = 'internal scratch']
  %s0 = inlined_call_operand.hbm [shape: f32[16,128], index: 0, kind: input, shape index: {}]
  %s1 = inlined_call_operand.hbm [shape: f32[16,128], index: 1, kind: input, shape index: {}]
  %s2 = inlined_call_operand.hbm [shape: f32[1,8,128], index: 2, kind: output, shape index: {}]
  %s3 = sld [smem:[#allocation0]]
  $region30: #{tpu_custom_call.1} parent=0
    _
  %s5 = ssub.s32 1, %s3
  %s6 = scalar_select 0, %s5, %s3
  $region1: #{tpu_custom_call.1} parent=0
    #allocation2 [shape = 'u8[8192]{0}', space=vmem, size = 0x2000, scoped, tag = 'input window, operand 0, single buffered']
    #allocation3 [shape = 's32[1]{0}', space=sflag, size = 0x4, scoped, tag = 'scoped memory for tpu_custom_call.1']
    #allocation4 [shape = 's32[1]{0}', space=sflag, size = 0x4, scoped, tag = 'scoped memory for tpu_custom_call.1']
    #allocation5 [shape = 'u8[8192]{0}', space=vmem, size = 0x2000, scoped, tag = 'input window, operand 1, single buffered']
    #allocation6 [shape = 's32[1]{0}', space=sflag, size = 0x4, scoped, tag = 'scoped memory for tpu_custom_call.1']
    #allocation7 [shape = 'u8[4096]{0}', space=vmem, size = 0x1000, scoped, tag = 'output window, operand 0, single buffered']
    %7 = vsyncpa [#allocation3], 0
    %8 = vsyncpa [#allocation6], 0
    %9 = vsyncpa [#allocation4], 0
    // Predicated region
    $region2: #{tpu_custom_call.1} parent=1 // pred_check
      _
    $region3: #{tpu_custom_call.1} parent=1 // pred_check_branch
      %11 = sbr.rel (0) target = $region5
    $region4: #{tpu_custom_call.1} parent=1 // pred_region
      %s12 = sadd.s32 0, 0
      %s13 = smul.u32 2, %s12
      %s15 = ssub.s32 256, 256
      %16 = vsyncadd [#allocation3], %s15
      %s17 = smul.addr %s13, 128
      %s18 = scalar_lea.hbm %s0, %s17
      %s19 = sshll.u32 [#allocation2], 4
      %s20 = int_to_ptr.vmem [resolvable:$true] %s19
      %25 = dma.hbm_to_vmem [thread:$0]  %s18, 256, %s20, [#allocation3], 128, 128, 8
    $region5: #{tpu_custom_call.1} parent=1 // pred_fallthru
      _
    // Predicated region
    $region6: #{tpu_custom_call.1} parent=1 // pred_check
      _
    $region7: #{tpu_custom_call.1} parent=1 // pred_check_branch
      %27 = sbr.rel (0) target = $region9
    $region8: #{tpu_custom_call.1} parent=1 // pred_region
      %s28 = sadd.s32 0, 0
      %s29 = smul.u32 2, %s28
      %s31 = ssub.s32 256, 256
      %32 = vsyncadd [#allocation6], %s31
      %s33 = smul.addr %s29, 128
      %s34 = scalar_lea.hbm %s1, %s33
      %s35 = sshll.u32 [#allocation5], 4
      %s36 = int_to_ptr.vmem [resolvable:$true] %s35
      %41 = dma.hbm_to_vmem [thread:$0]  %s34, 256, %s36, [#allocation6], 128, 128, 8
    $region9: #{tpu_custom_call.1} parent=1 // pred_fallthru
      _
    // Predicated region
    $region10: #{tpu_custom_call.1} parent=1 // pred_check
      _
    $region11: #{tpu_custom_call.1} parent=1 // pred_check_branch
      %43 = sbr.rel (0) target = $region13
    $region12: #{tpu_custom_call.1} parent=1 // pred_region
      %44 = dma.done [#allocation3], 256
    $region13: #{tpu_custom_call.1} parent=1 // pred_fallthru
      _
    // Predicated region
    $region14: #{tpu_custom_call.1} parent=1 // pred_check
      _
    $region15: #{tpu_custom_call.1} parent=1 // pred_check_branch
      %46 = sbr.rel (0) target = $region17
    $region16: #{tpu_custom_call.1} parent=1 // pred_region
      %47 = dma.done [#allocation6], 256
    $region17: #{tpu_custom_call.1} parent=1 // pred_fallthru
      _
    %s48 = sadd.s32 0, 0
    %s49 = smul.u32 2, %s48
    %s50 = sadd.s32 0, 0
    %s51 = smul.u32 2, %s50
    %p52 = scmp.eq.s32.totalorder 0, 0
    // Predicated region
    $region18: #{tpu_custom_call.1} parent=1 // pred_check
      %p53 = pneg %p52
    $region19: #{tpu_custom_call.1} parent=1 // pred_check_branch
      %55 = sbr.rel (%p53) target = $region21
    $region20: #{tpu_custom_call.1} parent=1 // pred_region
      %56 = vst [vmem:[#allocation7] sm:$0xff] 0.0
    $region21: #{tpu_custom_call.1} parent=1 // pred_fallthru
      _
    %v57 = vld [vmem:[#allocation2] sm:$0xff]
    %v58 = vld [vmem:[#allocation2 + $0x8] sm:$0xff]
    %v59 = vld [vmem:[#allocation5] sm:$0xff]
    %v60 = vld [vmem:[#allocation5 + $0x8] sm:$0xff]
    %v61 = vsub.f32 %v57, %v59
    %v62 = vsub.f32 %v58, %v60
    %v63 = vmul.f32 %v61, %v61
    %v64 = vmul.f32 %v62, %v62
    %v65 = vand.u32 2147483647, %v61
    %v66 = vand.u32 2147483647, %v62
    %v67 = vmul.f32 %v65, %v63
    %v68 = vmul.f32 %v66, %v64
    %v69 = vadd.f32 %v67, %v68
    %v70 = vld [vmem:[#allocation7] sm:$0xff]
    %v71 = vadd.f32 %v70, %v69
    %72 = vst [vmem:[#allocation7] sm:$0xff] %v71
    // Predicated region
    $region22: #{tpu_custom_call.1} parent=1 // pred_check
      _
    $region23: #{tpu_custom_call.1} parent=1 // pred_check_branch
      %74 = sbr.rel (0) target = $region25
    $region24: #{tpu_custom_call.1} parent=1 // pred_region
      %s76 = ssub.s32 128, 128
      %77 = vsyncadd [#allocation4], %s76
      %s79 = sshll.u32 [#allocation7], 4
      %s80 = int_to_ptr.vmem [resolvable:$true] %s79
      %82 = dma.vmem_to_hbm [thread:$0]  %s80, 128, %s2, [#allocation4]
    $region25: #{tpu_custom_call.1} parent=1 // pred_fallthru
      _
    // Predicated region
    $region26: #{tpu_custom_call.1} parent=1 // pred_check
      _
    $region27: #{tpu_custom_call.1} parent=1 // pred_check_branch
      %84 = sbr.rel (0) target = $region29
    $region28: #{tpu_custom_call.1} parent=1 // pred_region
      %85 = dma.done [#allocation4], 128
    $region29: #{tpu_custom_call.1} parent=1 // pred_fallthru
      _
    %86 = vsyncpa [#allocation3], 1
    %87 = vsyncpa [#allocation6], 1
    %88 = vsyncpa [#allocation4], 1

</llo_original>
